<compile_context>
chip_gen: v5e
topology: v5e:2x2
jax: 0.10.0
libtpu: 0.0.40
codegen_flags: <defaults>
</compile_context>

<pallas_src>
import functools
import math

import jax
import jax.numpy as jnp
from jax import lax
from jax.experimental import pallas as pl
from jax.experimental.pallas import tpu as pltpu

_LANE = 128


def _integral_act_kernel(x_ref, o_ref, *, n: int):
    x = x_ref[...].astype(jnp.float32)
    inv_sqrt_pi = jnp.float32(1.0 / math.sqrt(math.pi))

    if n == 0:
        # F_0 = exp(-x^2)/sqrt(pi)
        o_ref[...] = (jnp.exp(-x * x) * inv_sqrt_pi).astype(o_ref.dtype)
        return

    f1 = (lax.erf(x) + 1.0) * 0.5          # F_1 = (erf(x)+1)/2
    if n == 1:
        # f0 is only needed by the k >= 1 recursion steps; skip its exp here.
        o_ref[...] = f1.astype(o_ref.dtype)
        return

    f0 = jnp.exp(-x * x) * inv_sqrt_pi

    # Factorial-rescaled recursion: with G_k = (k-1)! * F_k (G_0 = F_0),
    #   G_{k+1} = x*G_k + b_k*G_{k-1},  b_1 = 1/2,  b_k = (k-1)/2  (k >= 2),
    # and F_n = G_n / (n-1)!.  Two muls + one add per step (no divides, no
    # per-step normalization multiply).
    g_prev, g = f0, f1
    for k in range(1, n):
        b_k = 0.5 if k == 1 else (k - 1) / 2.0
        g_prev, g = g, x * g + jnp.float32(b_k) * g_prev
    scale = jnp.float32(1.0 / math.factorial(n - 1))
    o_ref[...] = (g * scale).astype(o_ref.dtype)


def integral_activation(x: jax.Array, n: int) -> jax.Array:
    """Elementwise IntegralActivation(n).forward(x)."""
    orig_shape = x.shape
    dtype = x.dtype
    total = x.size
    if total == 0:
        return x

    # Robust half-dtype check: bf16/f16 pack 16 sublanes per vreg, f32 packs 8.
    half_dtypes = (jnp.dtype(jnp.bfloat16), jnp.dtype(jnp.float16))
    sub = 16 if jnp.dtype(dtype) in half_dtypes else 8
    itemsize = jnp.dtype(dtype).itemsize

    # Flatten (free) and view as (rows, 128): lane-dense, full-vreg stores.
    xf = x.reshape(-1)
    pad = 0
    if total % _LANE != 0:
        # Rare fallback for sizes that are not a multiple of 128 lanes: a small
        # pad is required just to make the 2D view possible.
        pad = _LANE - (total % _LANE)
        xf = jnp.pad(xf, (0, pad))
    rows = (total + pad) // _LANE
    x2d = xf.reshape(rows, _LANE)

    # ~2 MiB per block buffer (in + out, double-buffered => ~8 MiB VMEM, inside
    # the scoped-VMEM default on v5e/v6e/v7x).  block_rows is a multiple of the
    # sublane granule, or equals the full row count for small inputs (legal).
    target_rows = max(sub, ((2 * 1024 * 1024) // (itemsize * _LANE) // sub) * sub)
    block_rows = rows if rows <= target_rows else target_rows

    # Non-divisible grid: Pallas masks the ragged last block (reads of the
    # padded region are unspecified but finite/NaN garbage is fine because the
    # kernel is purely elementwise and OOB stores are discarded).
    grid = (pl.cdiv(rows, block_rows),)

    # Advisory cost estimate (erf polynomial ~25 ops + exp + 3 ops/step).
    flops_per_elem = 30 + 3 * max(n - 1, 0)
    n_transcendentals = 1 if n <= 1 else 2
    cost = pl.CostEstimate(
        flops=flops_per_elem * total,
        transcendentals=n_transcendentals * total,
        bytes_accessed=2 * total * itemsize,
    )

    out2d = pl.pallas_call(
        functools.partial(_integral_act_kernel, n=n),
        out_shape=jax.ShapeDtypeStruct((rows, _LANE), dtype),
        grid_spec=pltpu.PrefetchScalarGridSpec(
            num_scalar_prefetch=0,
            grid=grid,
            in_specs=[pl.BlockSpec((block_rows, _LANE), lambda i: (i, 0))],
            out_specs=pl.BlockSpec((block_rows, _LANE), lambda i: (i, 0)),
        ),
        compiler_params=pltpu.CompilerParams(
            dimension_semantics=("parallel",)),
        cost_estimate=cost,
    )(x2d)

    out = out2d.reshape(-1)
    if pad:
        out = out[:total]
    return out.reshape(orig_shape)


def _reference(x: jax.Array, n: int) -> jax.Array:
    """Pure-JAX reference of the same recursion (original divide form)."""
    xf = x.astype(jnp.float32)
    f0 = jnp.exp(-xf * xf) / jnp.sqrt(jnp.float32(jnp.pi))
    if n == 0:
        return f0.astype(x.dtype)
    f1 = (lax.erf(xf) + 1.0) * 0.5
    fk_prev, fk = f0, f1
    for k in range(1, n):
        fk_prev, fk = fk, (xf / k) * fk + fk_prev / (2.0 * k)
    return fk.astype(x.dtype)


if __name__ == "__main__":
    key = jax.random.PRNGKey(0)
    x = jax.random.normal(key, (2, 4, 16, 16), dtype=jnp.float32)  # NCHW

    ok = True
    for n in (1, 3):  # n=1: plain Phi(x); n=3: 2-fold repeated integral
        out = integral_activation(x, n)
        out = jax.block_until_ready(out)
        ref = _reference(x, n)
        ok &= (out.shape == x.shape and out.dtype == x.dtype)
        ok &= bool(jnp.allclose(out, ref, atol=1e-5, rtol=1e-5))

    assert ok
    print("KERNEL_OK")
</pallas_src>

<mosaic_0001>
module attributes {stable_mosaic.version = 11 : i64} {
  func.func @_integral_act_kernel(%arg0: i32, %arg1: memref<16x128xf32, #tpu.memory_space<vmem>>, %arg2: memref<16x128xf32, #tpu.memory_space<vmem>>) attributes {dimension_semantics = [#tpu.dimension_semantics<parallel>], iteration_bounds = array<i64: 1>, scalar_prefetch = 0 : i64, scratch_operands = 0 : i64, tpu.core_type = #tpu.core_type<tc>, window_params = [{transform_indices = @transform_0, window_bounds = array<i64: 16, 128>}, {transform_indices = @transform_1, window_bounds = array<i64: 16, 128>}]} {
    %c0 = arith.constant 0 : index
    %c0_0 = arith.constant 0 : index
    %0 = vector.load %arg1[%c0, %c0_0] : memref<16x128xf32, #tpu.memory_space<vmem>>, vector<16x128xf32>
    %1 = math.erf %0 : vector<16x128xf32>
    %cst = arith.constant 1.000000e+00 : f32
    %2 = vector.broadcast %cst : f32 to vector<16x128xf32>
    %3 = arith.addf %1, %2 : vector<16x128xf32>
    %cst_1 = arith.constant 5.000000e-01 : f32
    %4 = vector.broadcast %cst_1 : f32 to vector<16x128xf32>
    %5 = arith.mulf %3, %4 : vector<16x128xf32>
    %c0_2 = arith.constant 0 : index
    %c0_3 = arith.constant 0 : index
    %6 = vector.load %arg2[%c0_2, %c0_3] : memref<16x128xf32, #tpu.memory_space<vmem>>, vector<16x128xf32>
    tpu.vector_store %arg2[%c0_2, %c0_3], %5 {strides = array<i32>} : memref<16x128xf32, #tpu.memory_space<vmem>>, vector<16x128xf32>,
    return
  }
  func.func @transform_0(%arg0: i32) -> (i32, i32) {
    %c0_i32 = arith.constant 0 : i32
    %c0_i32_0 = arith.constant 0 : i32
    return %arg0, %c0_i32 : i32, i32
  }
  func.func @transform_1(%arg0: i32) -> (i32, i32) {
    %c0_i32 = arith.constant 0 : i32
    %c0_i32_0 = arith.constant 0 : i32
    return %arg0, %c0_i32 : i32, i32
  }
}

</mosaic_0001>

<llo_original>
// kernel: tpu_custom_call.1
$region0: #{tpu_custom_call.1}
  #allocation0 [shape = 'u32[]', space=smem, size = 0x4, offset = 0x4, fixed_abs, tag = 'smem constant byte address 0x4 - core index']
  #allocation1 [shape = 'u32[72,128]{1,0:T(1,128)}', space=vmem, size = 0x9000, scoped, tag = 'internal scratch']
  %s0 = inlined_call_operand.hbm [shape: f32[16,128], index: 0, kind: input, shape index: {}]
  %s1 = inlined_call_operand.hbm [shape: f32[16,128], index: 1, kind: output, shape index: {}]
  %s2 = sld [smem:[#allocation0]]
  $region18: #{tpu_custom_call.1} parent=0
    _
  %s4 = ssub.s32 1, %s2
  %s5 = scalar_select 0, %s4, %s2
  $region1: #{tpu_custom_call.1} parent=0
    #allocation2 [shape = 'u8[8192]{0}', space=vmem, size = 0x2000, scoped, tag = 'input window, operand 0, single buffered']
    #allocation3 [shape = 's32[1]{0}', space=sflag, size = 0x4, scoped, tag = 'scoped memory for tpu_custom_call.1']
    #allocation4 [shape = 's32[1]{0}', space=sflag, size = 0x4, scoped, tag = 'scoped memory for tpu_custom_call.1']
    #allocation5 [shape = 'u8[8192]{0}', space=vmem, size = 0x2000, scoped, tag = 'output window, operand 0, single buffered']
    %6 = vsyncpa [#allocation3], 0
    %7 = vsyncpa [#allocation4], 0
    // Predicated region
    $region2: #{tpu_custom_call.1} parent=1 // pred_check
      _
    $region3: #{tpu_custom_call.1} parent=1 // pred_check_branch
      %9 = sbr.rel (0) target = $region5
    $region4: #{tpu_custom_call.1} parent=1 // pred_region
      %11 = vsyncadd [#allocation3], 0
      %s12 = sshll.u32 %s0, 4
      %s13 = int_to_ptr.hbm [resolvable:$true] %s12
      %s14 = sshll.u32 [#allocation2], 4
      %s15 = int_to_ptr.vmem [resolvable:$true] %s14
      %20 = dma.hbm_to_vmem [thread:$0]  %s13, 256, %s15, [#allocation3], 128, 128, 8
    $region5: #{tpu_custom_call.1} parent=1 // pred_fallthru
      _
    // Predicated region
    $region6: #{tpu_custom_call.1} parent=1 // pred_check
      _
    $region7: #{tpu_custom_call.1} parent=1 // pred_check_branch
      %22 = sbr.rel (0) target = $region9
    $region8: #{tpu_custom_call.1} parent=1 // pred_region
      %24 = dma.done [#allocation3], 256
    $region9: #{tpu_custom_call.1} parent=1 // pred_fallthru
      _
    %v25 = vld [vmem:[#allocation2] sm:$0xff]
    %v26 = vld [vmem:[#allocation2 + $0x8] sm:$0xff]
    %v27 = vmul.f32 %v25, %v25
    %v28 = vmin.f32 16.0, %v27
    %v29 = vmul.f32 %v28, 2.1237322e-06
    %v30 = vadd.f32 %v29, 0.00028619796
    %v31 = vmul.f32 %v28, %v30
    %v32 = vadd.f32 %v31, 0.0036580483
    %v33 = vmul.f32 %v28, %v32
    %v34 = vadd.f32 %v33, 0.05243302
    %v35 = vmul.f32 %v28, %v34
    %v36 = vadd.f32 %v35, 0.18741608
    %v37 = vmul.f32 %v28, %v36
    %v38 = vadd.f32 %v37, 1.1283791
    %v39 = vmul.f32 %v25, %v38
    %v40 = vmul.f32 %v28, 3.8918573e-05
    %v41 = vadd.f32 %v40, 0.001143296
    %v42 = vmul.f32 %v28, %v41
    %v43 = vadd.f32 %v42, 0.014752088
    %v44 = vmul.f32 %v28, %v43
    %v45 = vadd.f32 %v44, 0.112945676
    %v46 = vmul.f32 %v28, %v45
    %v47 = vadd.f32 %v46, 0.4994258
    %v48 = vmul.f32 %v28, %v47
    %v49 = vadd.f32 %v48, 1.0
    %v50 = vrcp.pop %v49
    %v51 = vmul.f32 %v49, %v50
    %v52 = vsub.f32 1.0, %v51
    %v53 = vmul.f32 %v50, %v52
    %v54 = vadd.f32 %v50, %v53
    %vm55 = vweird.f32 %v49
    %vm56 = vweird.f32 %v50
    %vm57 = vmor %vm55, %vm56
    %v58 = vsel %vm57, %v50, %v54
    %v59 = vand.u32 2147483647, %v49
    %vm60 = vcmp.eq.f32.partialorder %v59, 8.507059e+37
    %v61 = vand.u32 %v49, 2147483648
    %v62 = vor.u32 1.1754944e-38, %v61
    %v63 = vsel %vm60, %v62, %v58
    %v64 = vmul.f32 %v39, %v63
    %v65 = vmin.f32 %v64, 1.0
    %v66 = vmax.f32 %v65, -1.0
    %v67 = vmul.f32 %v26, %v26
    %v68 = vmin.f32 16.0, %v67
    %v69 = vmul.f32 %v68, 2.1237322e-06
    %v70 = vadd.f32 %v69, 0.00028619796
    %v71 = vmul.f32 %v68, %v70
    %v72 = vadd.f32 %v71, 0.0036580483
    %v73 = vmul.f32 %v68, %v72
    %v74 = vadd.f32 %v73, 0.05243302
    %v75 = vmul.f32 %v68, %v74
    %v76 = vadd.f32 %v75, 0.18741608
    %v77 = vmul.f32 %v68, %v76
    %v78 = vadd.f32 %v77, 1.1283791
    %v79 = vmul.f32 %v26, %v78
    %v80 = vmul.f32 %v68, 3.8918573e-05
    %v81 = vadd.f32 %v80, 0.001143296
    %v82 = vmul.f32 %v68, %v81
    %v83 = vadd.f32 %v82, 0.014752088
    %v84 = vmul.f32 %v68, %v83
    %v85 = vadd.f32 %v84, 0.112945676
    %v86 = vmul.f32 %v68, %v85
    %v87 = vadd.f32 %v86, 0.4994258
    %v88 = vmul.f32 %v68, %v87
    %v89 = vadd.f32 %v88, 1.0
    %v90 = vrcp.pop %v89
    %v91 = vmul.f32 %v89, %v90
    %v92 = vsub.f32 1.0, %v91
    %v93 = vmul.f32 %v90, %v92
    %v94 = vadd.f32 %v90, %v93
    %vm95 = vweird.f32 %v89
    %vm96 = vweird.f32 %v90
    %vm97 = vmor %vm95, %vm96
    %v98 = vsel %vm97, %v90, %v94
    %v99 = vand.u32 2147483647, %v89
    %vm100 = vcmp.eq.f32.partialorder %v99, 8.507059e+37
    %v101 = vand.u32 %v89, 2147483648
    %v102 = vor.u32 1.1754944e-38, %v101
    %v103 = vsel %vm100, %v102, %v98
    %v104 = vmul.f32 %v79, %v103
    %v105 = vmin.f32 %v104, 1.0
    %v106 = vmax.f32 %v105, -1.0
    %v107 = vadd.f32 %v66, 1.0
    %v108 = vadd.f32 %v106, 1.0
    %v109 = vmul.f32 %v107, 0.5
    %v110 = vmul.f32 %v108, 0.5
    %111 = vst [vmem:[#allocation5] sm:$0xff] %v109
    %112 = vst [vmem:[#allocation5 + $0x8] sm:$0xff] %v110
    // Predicated region
    $region10: #{tpu_custom_call.1} parent=1 // pred_check
      _
    $region11: #{tpu_custom_call.1} parent=1 // pred_check_branch
      %114 = sbr.rel (0) target = $region13
    $region12: #{tpu_custom_call.1} parent=1 // pred_region
      %116 = vsyncadd [#allocation4], 0
      %s117 = sshll.u32 [#allocation5], 4
      %s118 = int_to_ptr.vmem [resolvable:$true] %s117
      %s119 = sshll.u32 %s1, 4
      %s120 = int_to_ptr.hbm [resolvable:$true] %s119
      %125 = dma.vmem_to_hbm [thread:$0]  %s118, 256, %s120, [#allocation4], 128, 128, 8
    $region13: #{tpu_custom_call.1} parent=1 // pred_fallthru
      _
    // Predicated region
    $region14: #{tpu_custom_call.1} parent=1 // pred_check
      _
    $region15: #{tpu_custom_call.1} parent=1 // pred_check_branch
      %127 = sbr.rel (0) target = $region17
    $region16: #{tpu_custom_call.1} parent=1 // pred_region
      %129 = dma.done [#allocation4], 256
    $region17: #{tpu_custom_call.1} parent=1 // pred_fallthru
      _
    %130 = vsyncpa [#allocation3], 1
    %131 = vsyncpa [#allocation4], 1

</llo_original>
